<compile_context>
chip_gen: v7x
topology: tpu7x:2x2x1
jax: 0.10.0
libtpu: 0.0.40
codegen_flags: <defaults>
</compile_context>

<pallas_src>
import math

import jax
import jax.numpy as jnp
from jax.experimental import pallas as pl
from jax.experimental.pallas import tpu as pltpu


# ---------------------------------------------------------------------------
# Kernels
# ---------------------------------------------------------------------------
def _quant_kernel_vmem(toi_ref, tof_ref, x_ref, o_ref):
    # toi/tof blocks are (row_tile,1) or (1,lane_tile) -> broadcast.
    # q = (input * toi).int() -> truncate toward zero via int32 cast.
    # (If |x*toi| >= 2^31 the f32->int32 cast is implementation-defined on
    #  both backends; not clamped here to preserve reference semantics.)
    q = (x_ref[...] * toi_ref[...]).astype(jnp.int32).astype(jnp.float32)
    # clamp in the reference acts on a discarded temporary => no-op here.
    o_ref[...] = q * tof_ref[...]


def _quant_kernel_smem(toi_ref, tof_ref, x_ref, o_ref):
    toi = toi_ref[0]
    tof = tof_ref[0]
    q = (x_ref[...] * toi).astype(jnp.int32).astype(jnp.float32)
    o_ref[...] = q * tof


# ---------------------------------------------------------------------------
# Tiling helpers
# ---------------------------------------------------------------------------
def _vmem_limit_bytes():
    """Generation-aware scoped VMEM limit: 64 MiB on 128-MiB-VMEM chips
    (v5e/v6e), 32 MiB otherwise (v7x has only 64 MiB physical)."""
    try:
        info = pltpu.get_tpu_info()
        phys = getattr(info, "vmem_capacity_bytes", None)
        if phys is not None and int(phys) >= 96 * 1024 * 1024:
            return 64 * 1024 * 1024
    except Exception:
        pass
    return 32 * 1024 * 1024


def _choose_tiles(R, L, block_bytes):
    """Pick (row_tile, lane_tile) for an (R, L) f32 slab."""
    if L % 128 == 0:
        lane_tile = min(L, 8192)
    elif L > 1024:
        # Large unaligned L: lane-dense 128-multiple tiles; Pallas masks the
        # ragged last lane block.  Keeps block bytes bounded on v7x.
        lane_tile = min((L // 128) * 128, 8192)
    else:
        # Small unaligned L: full-dim last block (allowed by layout rules).
        lane_tile = L

    rows_target = max(8, block_bytes // (lane_tile * 4))
    if R <= rows_target:
        row_tile = R
    else:
        row_tile = (rows_target // 8) * 8

    # v7x megacore: for large arrays make sure the grid has >= 2 blocks along
    # a "parallel" axis so both TensorCores get work.
    lane_blocks = -(-L // lane_tile)
    if (row_tile == R and lane_blocks == 1 and R >= 16
            and R * L * 4 > (1 << 20)):
        row_tile = (((R + 1) // 2) + 7) // 8 * 8

    return row_tile, lane_tile


def _tensorwise_factorization(n):
    """n is a multiple of 128; pick a lane-dense (rows, lane) split."""
    for lane in (8192, 4096, 2048, 1024, 512, 256, 128):
        if n % lane == 0 and n // lane >= 8:
            return n // lane, lane
    for lane in (8192, 4096, 2048, 1024, 512, 256, 128):
        if n % lane == 0:
            return n // lane, lane
    return n // 128, 128  # unreachable: n % 128 == 0


# ---------------------------------------------------------------------------
# pallas_call wrapper
# ---------------------------------------------------------------------------
def _run_quant_kernel(x2d, toi, tof, scale_mode):
    """x2d: (R, L) f32.
    scale_mode: 'row'    -> toi/tof are (R, 1)
                'lane'   -> toi/tof are (1, L)
                'scalar' -> toi/tof are (1,) scalars (SMEM)
    """
    R, L = x2d.shape
    vmem_limit = _vmem_limit_bytes()
    block_bytes = max(2 << 20, min(6 << 20, vmem_limit // 6))
    row_tile, lane_tile = _choose_tiles(R, L, block_bytes)
    grid = (-(-R // row_tile), -(-L // lane_tile))

    x_spec = pl.BlockSpec((row_tile, lane_tile), lambda r, l: (r, l))
    o_spec = pl.BlockSpec((row_tile, lane_tile), lambda r, l: (r, l))

    if scale_mode == "scalar":
        kernel = _quant_kernel_smem
        scale_specs = [pl.BlockSpec(memory_space=pltpu.MemorySpace.SMEM),
                       pl.BlockSpec(memory_space=pltpu.MemorySpace.SMEM)]
    elif scale_mode == "row":
        kernel = _quant_kernel_vmem
        scale_specs = [pl.BlockSpec((row_tile, 1), lambda r, l: (r, 0)),
                       pl.BlockSpec((row_tile, 1), lambda r, l: (r, 0))]
    else:  # "lane"
        kernel = _quant_kernel_vmem
        scale_specs = [pl.BlockSpec((1, lane_tile), lambda r, l: (0, l)),
                       pl.BlockSpec((1, lane_tile), lambda r, l: (0, l))]

    return pl.pallas_call(
        kernel,
        out_shape=jax.ShapeDtypeStruct((R, L), jnp.float32),
        grid_spec=pltpu.PrefetchScalarGridSpec(
            num_scalar_prefetch=0,
            grid=grid,
            in_specs=scale_specs + [x_spec],
            out_specs=o_spec,
        ),
        compiler_params=pltpu.CompilerParams(
            dimension_semantics=("parallel", "parallel"),
            vmem_limit_bytes=vmem_limit,
        ),
    )(toi, tof, x2d)


# ---------------------------------------------------------------------------
# Forward wrapper (equivalent of DecimalQuantizer.forward with use_uint=False,
# backward_passthrough=False, flip_axis=False, group_num=-1, t=0)
# ---------------------------------------------------------------------------
def decimal_quantizer_forward(tensor, bits, scaler, channel_index=-1):
    del bits  # only used by the (no-op) clamp / backward in the reference
    x = jnp.asarray(tensor, jnp.float32)
    scaler = jnp.asarray(scaler, jnp.float32)

    # weight = (1/scaler).nan_to_num(posinf=1, neginf=1).log2().round()
    inv = jnp.nan_to_num(1.0 / scaler, posinf=1.0, neginf=1.0)
    decimal = jnp.round(jnp.log2(inv))
    toi = jnp.exp2(decimal).reshape(-1).astype(jnp.float32)
    tof = jnp.exp2(-decimal).reshape(-1).astype(jnp.float32)

    orig_shape = x.shape
    channelwise = scaler.size > 1

    # TODO(synk): the AgglomerativeClustering group-scaler branch (active only
    # after `group_timeout` optimize() steps with group_num > 0) has no clean
    # Pallas equivalent and is not implemented.

    if channelwise:
        ci = channel_index % x.ndim
        C = x.shape[ci]
        if ci == x.ndim - 1:
            # Channel-last: free (B, C) view, per-lane scale.  If C is not a
            # multiple of 128, group g = 128/gcd(C,128) rows into one strip
            # (free contiguous view) so the last dim is lcm(C,128), a
            # multiple of 128 -> unmasked lane-dense stores.
            B = x.size // C
            g = 128 // math.gcd(C, 128)
            if g > 1 and B % g == 0:
                x2d = x.reshape(B // g, g * C)
                toi2 = jnp.tile(toi, g).reshape(1, g * C)
                tof2 = jnp.tile(tof, g).reshape(1, g * C)
            else:
                x2d = x.reshape(B, C)
                toi2 = toi.reshape(1, C)
                tof2 = tof.reshape(1, C)
            out2d = _run_quant_kernel(x2d, toi2, tof2, "lane")
        else:
            # Channel not last: free (B*C, L) view (row index = b*C + c),
            # per-row scale tiled over the leading dims (tiny array).
            B = 1
            for d in x.shape[:ci]:
                B *= d
            L = 1
            for d in x.shape[ci + 1:]:
                L *= d
            x2d = x.reshape(B * C, L)
            toi_r = jnp.tile(toi, B).reshape(B * C, 1)
            tof_r = jnp.tile(tof, B).reshape(B * C, 1)
            out2d = _run_quant_kernel(x2d, toi_r, tof_r, "row")
        return out2d.reshape(orig_shape)

    # Tensor-wise (scalar scaler): run the kernel on the 128-aligned prefix
    # (free slice/view) with the scalar scale in SMEM; handle the <128-element
    # tail in plain JAX (no full-tensor pad copy).
    S = x.size
    xf = x.reshape(-1)
    toi_s = toi.reshape(1)
    tof_s = tof.reshape(1)
    main = (S // 128) * 128

    pieces = []
    if main > 0:
        rows, lane = _tensorwise_factorization(main)
        out_main = _run_quant_kernel(
            xf[:main].reshape(rows, lane), toi_s, tof_s, "scalar").reshape(-1)
        pieces.append(out_main)
    if main < S:
        tail = xf[main:]
        q_tail = (tail * toi_s[0]).astype(jnp.int32).astype(jnp.float32)
        pieces.append(q_tail * tof_s[0])
    outf = pieces[0] if len(pieces) == 1 else jnp.concatenate(pieces)
    return outf.reshape(orig_shape)


# ---------------------------------------------------------------------------
# Pure-JAX reference mirroring the PyTorch code path
# ---------------------------------------------------------------------------
def _reference(x, scaler, channel_index):
    inv = jnp.nan_to_num(1.0 / scaler, posinf=1.0, neginf=1.0)
    dec = jnp.round(jnp.log2(inv))
    if scaler.size > 1:
        shape = [1] * x.ndim
        shape[channel_index] = -1
        dec = dec.reshape(shape)
    toi = jnp.exp2(dec)
    tof = jnp.exp2(-dec)
    q = (x * toi).astype(jnp.int32).astype(jnp.float32)
    return q * tof


if __name__ == "__main__":
    key = jax.random.PRNGKey(0)
    bits = 8
    # NCHW activation, small shapes
    x = jax.random.normal(key, (2, 4, 16, 16), dtype=jnp.float32) * 3.0

    # Channel-wise scaler (channel_index=1), as DecimalQuantizer.optimize
    # would produce on step 0: max(|x_c|) / 2**(bits-1)
    xc = jnp.moveaxis(x, 1, 0).reshape(4, -1)
    scaler_cw = jnp.max(jnp.abs(xc), axis=1) / (2.0 ** (bits - 1))

    out_cw = jax.block_until_ready(
        decimal_quantizer_forward(x, bits, scaler_cw, channel_index=1))
    ref_cw = _reference(x, scaler_cw, 1)
    assert out_cw.shape == x.shape and out_cw.dtype == jnp.float32
    assert jnp.array_equal(out_cw, ref_cw), "channelwise (NCHW) mismatch"

    # Channel-last (NHWC) layout, channel_index=-1 with a per-channel scaler:
    # exercises the grouped lane-dense path (C=4 -> strips of 32 rows, 128 lanes).
    x_nhwc = jnp.transpose(x, (0, 2, 3, 1))
    out_cl = jax.block_until_ready(
        decimal_quantizer_forward(x_nhwc, bits, scaler_cw, channel_index=-1))
    ref_cl = _reference(x_nhwc, scaler_cw, -1)
    assert out_cl.shape == x_nhwc.shape
    assert jnp.array_equal(out_cl, ref_cl), "channel-last mismatch"

    # Tensor-wise scaler (channel_index=-1, scalar scaler)
    scaler_tw = jnp.max(jnp.abs(x)) / (2.0 ** (bits - 1))
    out_tw = jax.block_until_ready(
        decimal_quantizer_forward(x, bits, scaler_tw, channel_index=-1))
    ref_tw = _reference(x, scaler_tw, -1)
    assert out_tw.shape == x.shape
    assert jnp.array_equal(out_tw, ref_tw), "tensorwise mismatch"

    print("KERNEL_OK")
</pallas_src>

<mosaic_0001>
module attributes {stable_mosaic.version = 11 : i64} {
  func.func @_quant_kernel_vmem(%arg0: i32, %arg1: i32, %arg2: memref<8x1xf32, #tpu.memory_space<vmem>>, %arg3: memref<8x1xf32, #tpu.memory_space<vmem>>, %arg4: memref<8x256xf32, #tpu.memory_space<vmem>>, %arg5: memref<8x256xf32, #tpu.memory_space<vmem>>) attributes {dimension_semantics = [#tpu.dimension_semantics<parallel>, #tpu.dimension_semantics<parallel>], iteration_bounds = array<i64: 1, 1>, scalar_prefetch = 0 : i64, scratch_operands = 0 : i64, tpu.core_type = #tpu.core_type<tc>, window_params = [{transform_indices = @transform_0, window_bounds = array<i64: 8, 1>}, {transform_indices = @transform_1, window_bounds = array<i64: 8, 1>}, {transform_indices = @transform_2, window_bounds = array<i64: 8, 256>}, {transform_indices = @transform_3, window_bounds = array<i64: 8, 256>}]} {
    %c0 = arith.constant 0 : index
    %c0_0 = arith.constant 0 : index
    %0 = vector.load %arg4[%c0, %c0_0] : memref<8x256xf32, #tpu.memory_space<vmem>>, vector<8x256xf32>
    %c0_1 = arith.constant 0 : index
    %c0_2 = arith.constant 0 : index
    %1 = vector.load %arg2[%c0_1, %c0_2] : memref<8x1xf32, #tpu.memory_space<vmem>>, vector<8x1xf32>
    %2 = vector.broadcast %1 : vector<8x1xf32> to vector<8x256xf32>
    %3 = arith.mulf %0, %2 : vector<8x256xf32>
    %4 = arith.fptosi %3 : vector<8x256xf32> to vector<8x256xi32>
    %5 = arith.sitofp %4 : vector<8x256xi32> to vector<8x256xf32>
    %c0_3 = arith.constant 0 : index
    %c0_4 = arith.constant 0 : index
    %6 = vector.load %arg3[%c0_3, %c0_4] : memref<8x1xf32, #tpu.memory_space<vmem>>, vector<8x1xf32>
    %7 = vector.broadcast %6 : vector<8x1xf32> to vector<8x256xf32>
    %8 = arith.mulf %5, %7 : vector<8x256xf32>
    %c0_5 = arith.constant 0 : index
    %c0_6 = arith.constant 0 : index
    %9 = vector.load %arg5[%c0_5, %c0_6] : memref<8x256xf32, #tpu.memory_space<vmem>>, vector<8x256xf32>
    tpu.vector_store %arg5[%c0_5, %c0_6], %8 {strides = array<i32>} : memref<8x256xf32, #tpu.memory_space<vmem>>, vector<8x256xf32>,
    return
  }
  func.func @transform_0(%arg0: i32, %arg1: i32) -> (i32, i32) {
    %c0_i32 = arith.constant 0 : i32
    %c0_i32_0 = arith.constant 0 : i32
    return %arg0, %c0_i32 : i32, i32
  }
  func.func @transform_1(%arg0: i32, %arg1: i32) -> (i32, i32) {
    %c0_i32 = arith.constant 0 : i32
    %c0_i32_0 = arith.constant 0 : i32
    return %arg0, %c0_i32 : i32, i32
  }
  func.func @transform_2(%arg0: i32, %arg1: i32) -> (i32, i32) {
    %c0_i32 = arith.constant 0 : i32
    return %arg0, %arg1 : i32, i32
  }
  func.func @transform_3(%arg0: i32, %arg1: i32) -> (i32, i32) {
    %c0_i32 = arith.constant 0 : i32
    return %arg0, %arg1 : i32, i32
  }
}

</mosaic_0001>

<llo_original>
// kernel: tpu_custom_call.1
$region0: #{tpu_custom_call.1}
  #allocation0 [shape = 'u32[]', space=smem, size = 0x4, offset = 0x4, fixed_abs, tag = 'smem constant byte address 0x4 - core index']
  #allocation1 [shape = 'u32[144,128]{1,0:T(1,128)}', space=vmem, size = 0x12000, scoped, tag = 'internal scratch']
  %s0 = inlined_call_operand.vmem [shape: f32[8,1], index: 0, kind: input, shape index: {}]
  %s1 = inlined_call_operand.vmem [shape: f32[8,1], index: 1, kind: input, shape index: {}]
  %s2 = inlined_call_operand.vmem [shape: f32[8,256], index: 2, kind: input, shape index: {}]
  %s3 = inlined_call_operand.hbm [shape: f32[8,256], index: 3, kind: output, shape index: {}]
  %s4 = sld [smem:[#allocation0]]
  $region22: #{tpu_custom_call.1} parent=0
    _
  %s6 = ssub.s32 1, %s4
  %s7 = scalar_select 0, %s6, %s4
  $region1: #{tpu_custom_call.1} parent=0
    #allocation2 [shape = 'u8[8192]{0}', space=vmem, size = 0x2000, scoped, tag = 'output window, operand 0, single buffered']
    #allocation3 [shape = 's32[1]{0}', space=sflag, size = 0x4, scoped, tag = 'scoped memory for tpu_custom_call.1']
    %8 = vsyncpa [#allocation3], 0
    // Predicated region
    $region2: #{tpu_custom_call.1} parent=1 // pred_check
      _
    $region3: #{tpu_custom_call.1} parent=1 // pred_check_branch
      %10 = sbr.rel (0) target = $region5
    $region4: #{tpu_custom_call.1} parent=1 // pred_region
      _
    $region5: #{tpu_custom_call.1} parent=1 // pred_fallthru
      _
    // Predicated region
    $region6: #{tpu_custom_call.1} parent=1 // pred_check
      _
    $region7: #{tpu_custom_call.1} parent=1 // pred_check_branch
      %12 = sbr.rel (0) target = $region9
    $region8: #{tpu_custom_call.1} parent=1 // pred_region
      _
    $region9: #{tpu_custom_call.1} parent=1 // pred_fallthru
      _
    // Predicated region
    $region10: #{tpu_custom_call.1} parent=1 // pred_check
      _
    $region11: #{tpu_custom_call.1} parent=1 // pred_check_branch
      %14 = sbr.rel (0) target = $region13
    $region12: #{tpu_custom_call.1} parent=1 // pred_region
      _
    $region13: #{tpu_custom_call.1} parent=1 // pred_fallthru
      _
    %v15 = vld [vmem:[%s2] sm:$0xff]
    %v16 = vld [vmem:[%s2 + $0x8] sm:$0xff]
    %v17 = vld [vmem:[%s0] sm:$0xff]
    %19 = vset.pattern.permute.xlu0 0
    %20 = vperm.xlu0 %19, %v17
    %v21 = vpop.permute.xlu0 %20
    %v23 = vmul.f32 %v15, %v21
    %v24 = vmul.f32 %v16, %v21
    %v25 = vcvt.f32.s32.to.zero.pseudo %v23
    %v26 = vcvt.f32.s32.to.zero.pseudo %v24
    %v27 = vcvt.s32.f32 %v25
    %v28 = vcvt.s32.f32 %v26
    %v29 = vld [vmem:[%s1] sm:$0xff]
    %31 = vset.pattern.permute.xlu0 0
    %32 = vperm.xlu0 %31, %v29
    %v33 = vpop.permute.xlu0 %32
    %v35 = vmul.f32 %v27, %v33
    %v36 = vmul.f32 %v28, %v33
    %37 = vst [vmem:[#allocation2] sm:$0xff] %v35
    %38 = vst [vmem:[#allocation2 + $0x8] sm:$0xff] %v36
    // Predicated region
    $region14: #{tpu_custom_call.1} parent=1 // pred_check
      _
    $region15: #{tpu_custom_call.1} parent=1 // pred_check_branch
      %40 = sbr.rel (0) target = $region17
    $region16: #{tpu_custom_call.1} parent=1 // pred_region
      %s42 = ssub.s32 256, 256
      %43 = vsyncadd [#allocation3], %s42
      %s45 = sshll.u32 [#allocation2], 4
      %s46 = int_to_ptr.vmem [resolvable:$true] %s45
      %48 = dma.vmem_to_hbm [thread:$0]  %s46, 256, %s3, [#allocation3]
    $region17: #{tpu_custom_call.1} parent=1 // pred_fallthru
      _
    // Predicated region
    $region18: #{tpu_custom_call.1} parent=1 // pred_check
      _
    $region19: #{tpu_custom_call.1} parent=1 // pred_check_branch
      %50 = sbr.rel (0) target = $region21
    $region20: #{tpu_custom_call.1} parent=1 // pred_region
      %51 = dma.done [#allocation3], 256
    $region21: #{tpu_custom_call.1} parent=1 // pred_fallthru
      _
    %52 = vsyncpa [#allocation3], 1

</llo_original>
